<compile_context>
chip_gen: v6e
topology: v6e:2x2x1
jax: 0.10.0
libtpu: 0.0.40
codegen_flags: <defaults>
</compile_context>

<pallas_src>
import functools
import numpy as np
import jax
import jax.numpy as jnp
from jax.experimental import pallas as pl
from jax.experimental.pallas import tpu as pltpu

LIVING = 2  # zone_labels['LIVING']


def _gcn_norm_adj(edge_index, num_nodes):
    """Dense D^{-1/2}(A + I)D^{-1/2} exactly as PyG GCNConv's gcn_norm."""
    src, dst = np.asarray(edge_index)
    a = np.zeros((num_nodes, num_nodes), np.float32)
    a[dst, src] = 1.0                                  # message src -> dst
    a = a + np.eye(num_nodes, dtype=np.float32)        # add self loops
    deg = a.sum(axis=1)
    dis = 1.0 / np.sqrt(np.maximum(deg, 1e-12))
    return (dis[:, None] * a) * dis[None, :]


def _gcn_rnn_kernel(T, H,
                    x_ref, a_ref, wg_ref, bg_ref,
                    wih_ref, whh_ref, brnn_ref,
                    gamma_ref, beta_ref, wout_ref,
                    out_ref, xw_sc, rnn_sc):
    # --- GCNConv, LIVING node only: a_ref is [T, N*T] --------------------------
    xw = jnp.dot(x_ref[...], wg_ref[...], preferred_element_type=jnp.float32)
    z = jnp.dot(a_ref[...], xw, preferred_element_type=jnp.float32) + bg_ref[...]
    z = jnp.maximum(z, 0.0)                            # [T, H] LIVING sequence

    # --- hoisted RNN input projection: one [T,H]@[H,H] matmul + merged bias ----
    xw_sc[...] = (jnp.dot(z, wih_ref[...], preferred_element_type=jnp.float32)
                  + brnn_ref[...])

    # --- single-layer tanh RNN (h0 = 0), fully unrolled (T is static) ----------
    # Carry also accumulates BatchNorm batch stats (sum, sum of squares).
    def step(t, carry):
        h, s, ss = carry
        x_t = xw_sc[pl.ds(t, 1), :]
        h_new = jnp.tanh(
            x_t + jnp.dot(h, whh_ref[...], preferred_element_type=jnp.float32))
        rnn_sc[pl.ds(t, 1), :] = h_new
        return h_new, s + h_new, ss + h_new * h_new

    zero = jnp.zeros((1, H), jnp.float32)
    _, s, ss = jax.lax.fori_loop(0, T, step, (zero, zero, zero), unroll=True)

    # --- BatchNorm1d (training-mode biased batch stats over T) + ReLU ----------
    inv_t = jnp.float32(1.0 / T)
    mean = s * inv_t
    var = ss * inv_t - mean * mean
    rn = (rnn_sc[...] - mean) * jax.lax.rsqrt(var + 1e-5)
    rn = rn * gamma_ref[...] + beta_ref[...]
    rn = jnp.maximum(rn, 0.0)

    # --- output linear: [T, H] @ [H, 1]  (bias folded in the wrapper) ----------
    out_ref[...] = jnp.dot(rn, wout_ref[...], preferred_element_type=jnp.float32)


def gcn_rnn_forward(x_tnf, edge_index, params):
    T, N, F = x_tnf.shape
    H = params["w_gcn"].shape[1]

    a_hat = _gcn_norm_adj(edge_index, N)
    # Only the LIVING node's output is consumed downstream, so build just that
    # block of kron(A_hat, I_T):  [T, N*T], row t aggregates all nodes at time t.
    a_living = jnp.asarray(
        np.kron(a_hat[LIVING:LIVING + 1, :], np.eye(T, dtype=np.float32)))

    # node-major repack: [T, N, F] -> [N*T, F], row = n*T + t
    x2d = jnp.transpose(x_tnf, (1, 0, 2)).reshape(N * T, F)

    # Merge the two RNN biases once on the host side.
    b_rnn = params["b_ih"] + params["b_hh"]

    kernel = functools.partial(_gcn_rnn_kernel, T, H)
    vmem = pl.BlockSpec(memory_space=pltpu.MemorySpace.VMEM)
    out = pl.pallas_call(
        kernel,
        out_shape=jax.ShapeDtypeStruct((T, 1), jnp.float32),
        in_specs=[vmem] * 10,
        out_specs=vmem,
        scratch_shapes=[pltpu.VMEM((T, H), jnp.float32),   # hoisted x@W_ih + bias
                        pltpu.VMEM((T, H), jnp.float32)],  # RNN hidden states
    )(x2d, a_living,
      params["w_gcn"], params["b_gcn"],
      params["w_ih_t"], params["w_hh_t"], b_rnn,
      params["gamma"], params["beta"], params["w_out"])

    # Fold the tiny [1,1] output bias outside the kernel.
    return out + params["b_out"]


def reference_forward(x_tnf, edge_index, params):
    """Pure-JAX reference mirroring the PyTorch forward."""
    T, N, F = x_tnf.shape
    H = params["w_gcn"].shape[1]
    a_hat = jnp.asarray(_gcn_norm_adj(edge_index, N))
    xw = jnp.einsum('tnf,fh->tnh', x_tnf, params["w_gcn"])
    y = jnp.einsum('nm,tmh->tnh', a_hat, xw) + params["b_gcn"]
    y = jnp.maximum(y, 0.0)
    z = y[:, LIVING, :]                                    # [T, H]

    def step(h, x_t):
        h = jnp.tanh(x_t @ params["w_ih_t"] + params["b_ih"][0]
                     + h @ params["w_hh_t"] + params["b_hh"][0])
        return h, h

    _, r = jax.lax.scan(step, jnp.zeros((H,), jnp.float32), z)
    mean = r.mean(axis=0)
    var = ((r - mean) ** 2).mean(axis=0)
    rn = (r - mean) / jnp.sqrt(var + 1e-5) * params["gamma"][0] + params["beta"][0]
    rn = jnp.maximum(rn, 0.0)
    return rn @ params["w_out"] + params["b_out"][0]


if __name__ == "__main__":
    # Small shapes: node_features=4, hidden_channels=32, seq_len T=8,
    # num_nodes N=4 (the four zones).
    F, H, T, N = 4, 32, 8, 4

    key = jax.random.PRNGKey(0)
    ks = jax.random.split(key, 8)
    params = {
        "w_gcn":  (jax.random.normal(ks[0], (F, H), jnp.float32) * 0.3),
        "b_gcn":  jnp.zeros((1, H), jnp.float32),            # GCNConv bias init
        "w_ih_t": (jax.random.normal(ks[1], (H, H), jnp.float32) / np.sqrt(H)),
        "w_hh_t": (jax.random.normal(ks[2], (H, H), jnp.float32) / np.sqrt(H)),
        "b_ih":   (jax.random.normal(ks[3], (1, H), jnp.float32) * 0.1),
        "b_hh":   (jax.random.normal(ks[4], (1, H), jnp.float32) * 0.1),
        "gamma":  jnp.ones((1, H), jnp.float32),             # BatchNorm defaults
        "beta":   jnp.zeros((1, H), jnp.float32),
        "w_out":  (jax.random.normal(ks[5], (H, 1), jnp.float32) * 0.2),
        "b_out":  jnp.zeros((1, 1), jnp.float32),
    }

    x = jax.random.normal(ks[6], (T, N, F), jnp.float32)
    # undirected 4-cycle over the zones, both directions listed
    edge_index = np.array([[0, 1, 1, 2, 2, 3, 3, 0],
                           [1, 0, 2, 1, 3, 2, 0, 3]], dtype=np.int32)

    out = gcn_rnn_forward(x, edge_index, params)
    out = jax.block_until_ready(out)

    ref = jax.block_until_ready(reference_forward(x, edge_index, params))
    assert out.shape == (T, 1), out.shape
    np.testing.assert_allclose(np.asarray(out), np.asarray(ref),
                               rtol=1e-2, atol=1e-2)
    print("KERNEL_OK")
</pallas_src>

<mosaic_0001>
module attributes {stable_mosaic.version = 11 : i64} {
  func.func @_gcn_rnn_kernel(%arg0: memref<32x4xf32, #tpu.memory_space<vmem>>, %arg1: memref<8x32xf32, #tpu.memory_space<vmem>>, %arg2: memref<4x32xf32, #tpu.memory_space<vmem>>, %arg3: memref<1x32xf32, #tpu.memory_space<vmem>>, %arg4: memref<32x32xf32, #tpu.memory_space<vmem>>, %arg5: memref<32x32xf32, #tpu.memory_space<vmem>>, %arg6: memref<1x32xf32, #tpu.memory_space<vmem>>, %arg7: memref<1x32xf32, #tpu.memory_space<vmem>>, %arg8: memref<1x32xf32, #tpu.memory_space<vmem>>, %arg9: memref<32x1xf32, #tpu.memory_space<vmem>>, %arg10: memref<8x1xf32, #tpu.memory_space<vmem>>, %arg11: memref<8x32xf32, #tpu.memory_space<vmem>>, %arg12: memref<8x32xf32, #tpu.memory_space<vmem>>) attributes {dimension_semantics = [], scalar_prefetch = 0 : i64, scratch_operands = 2 : i64, tpu.core_type = #tpu.core_type<tc>} {
    %c0 = arith.constant 0 : index
    %c0_0 = arith.constant 0 : index
    %0 = vector.load %arg0[%c0, %c0_0] : memref<32x4xf32, #tpu.memory_space<vmem>>, vector<32x4xf32>
    %c0_1 = arith.constant 0 : index
    %c0_2 = arith.constant 0 : index
    %1 = vector.load %arg2[%c0_1, %c0_2] : memref<4x32xf32, #tpu.memory_space<vmem>>, vector<4x32xf32>
    %cst = arith.constant dense<0.000000e+00> : vector<32x32xf32>
    %2 = tpu.matmul %0, %1, %cst {dimension_numbers = #tpu.dot_dimension_numbers<[1], [0], [0], [1], [0, 0, 1, 1], [], []>} : vector<32x4xf32>, vector<4x32xf32>, vector<32x32xf32> -> vector<32x32xf32>
    %c0_3 = arith.constant 0 : index
    %c0_4 = arith.constant 0 : index
    %3 = vector.load %arg1[%c0_3, %c0_4] : memref<8x32xf32, #tpu.memory_space<vmem>>, vector<8x32xf32>
    %cst_5 = arith.constant dense<0.000000e+00> : vector<8x32xf32>
    %4 = tpu.matmul %3, %2, %cst_5 {dimension_numbers = #tpu.dot_dimension_numbers<[1], [0], [0], [1], [0, 0, 1, 1], [], []>} : vector<8x32xf32>, vector<32x32xf32>, vector<8x32xf32> -> vector<8x32xf32>
    %c0_6 = arith.constant 0 : index
    %c0_7 = arith.constant 0 : index
    %5 = vector.load %arg3[%c0_6, %c0_7] : memref<1x32xf32, #tpu.memory_space<vmem>>, vector<1x32xf32>
    %6 = vector.broadcast %5 : vector<1x32xf32> to vector<8x32xf32>
    %7 = arith.addf %4, %6 : vector<8x32xf32>
    %cst_8 = arith.constant 0.000000e+00 : f32
    %8 = vector.broadcast %cst_8 : f32 to vector<8x32xf32>
    %9 = arith.maximumf %7, %8 : vector<8x32xf32>
    %c0_9 = arith.constant 0 : index
    %c0_10 = arith.constant 0 : index
    %10 = vector.load %arg4[%c0_9, %c0_10] : memref<32x32xf32, #tpu.memory_space<vmem>>, vector<32x32xf32>
    %cst_11 = arith.constant dense<0.000000e+00> : vector<8x32xf32>
    %11 = tpu.matmul %9, %10, %cst_11 {dimension_numbers = #tpu.dot_dimension_numbers<[1], [0], [0], [1], [0, 0, 1, 1], [], []>} : vector<8x32xf32>, vector<32x32xf32>, vector<8x32xf32> -> vector<8x32xf32>
    %c0_12 = arith.constant 0 : index
    %c0_13 = arith.constant 0 : index
    %12 = vector.load %arg6[%c0_12, %c0_13] : memref<1x32xf32, #tpu.memory_space<vmem>>, vector<1x32xf32>
    %13 = vector.broadcast %12 : vector<1x32xf32> to vector<8x32xf32>
    %14 = arith.addf %11, %13 : vector<8x32xf32>
    %c0_14 = arith.constant 0 : index
    %c0_15 = arith.constant 0 : index
    %15 = vector.load %arg11[%c0_14, %c0_15] : memref<8x32xf32, #tpu.memory_space<vmem>>, vector<8x32xf32>
    tpu.vector_store %arg11[%c0_14, %c0_15], %14 {strides = array<i32>} : memref<8x32xf32, #tpu.memory_space<vmem>>, vector<8x32xf32>,
    %cst_16 = arith.constant 0.000000e+00 : f32
    %16 = vector.broadcast %cst_16 : f32 to vector<1x32xf32>
    %c0_i32 = arith.constant 0 : i32
    %17 = arith.index_cast %c0_i32 : i32 to index
    %c0_17 = arith.constant 0 : index
    %18 = vector.load %arg11[%17, %c0_17] : memref<8x32xf32, #tpu.memory_space<vmem>>, vector<1x32xf32>
    %c0_18 = arith.constant 0 : index
    %c0_19 = arith.constant 0 : index
    %19 = vector.load %arg5[%c0_18, %c0_19] : memref<32x32xf32, #tpu.memory_space<vmem>>, vector<32x32xf32>
    %cst_20 = arith.constant dense<0.000000e+00> : vector<1x32xf32>
    %20 = tpu.matmul %16, %19, %cst_20 {dimension_numbers = #tpu.dot_dimension_numbers<[1], [0], [0], [1], [0, 0, 1, 1], [], []>} : vector<1x32xf32>, vector<32x32xf32>, vector<1x32xf32> -> vector<1x32xf32>
    %21 = arith.addf %18, %20 : vector<1x32xf32>
    %22 = math.tanh %21 : vector<1x32xf32>
    %23 = arith.index_cast %c0_i32 : i32 to index
    %c0_21 = arith.constant 0 : index
    %24 = vector.load %arg12[%23, %c0_21] : memref<8x32xf32, #tpu.memory_space<vmem>>, vector<1x32xf32>
    tpu.vector_store %arg12[%23, %c0_21], %22 {strides = array<i32>} : memref<8x32xf32, #tpu.memory_space<vmem>>, vector<1x32xf32>,
    %25 = arith.addf %16, %22 : vector<1x32xf32>
    %26 = arith.mulf %22, %22 : vector<1x32xf32>
    %27 = arith.addf %16, %26 : vector<1x32xf32>
    %c1_i32 = arith.constant 1 : i32
    %28 = arith.index_cast %c1_i32 : i32 to index
    %c0_22 = arith.constant 0 : index
    %29 = vector.load %arg11[%28, %c0_22] : memref<8x32xf32, #tpu.memory_space<vmem>>, vector<1x32xf32>
    %c0_23 = arith.constant 0 : index
    %c0_24 = arith.constant 0 : index
    %30 = vector.load %arg5[%c0_23, %c0_24] : memref<32x32xf32, #tpu.memory_space<vmem>>, vector<32x32xf32>
    %cst_25 = arith.constant dense<0.000000e+00> : vector<1x32xf32>
    %31 = tpu.matmul %22, %30, %cst_25 {dimension_numbers = #tpu.dot_dimension_numbers<[1], [0], [0], [1], [0, 0, 1, 1], [], []>} : vector<1x32xf32>, vector<32x32xf32>, vector<1x32xf32> -> vector<1x32xf32>
    %32 = arith.addf %29, %31 : vector<1x32xf32>
    %33 = math.tanh %32 : vector<1x32xf32>
    %34 = arith.index_cast %c1_i32 : i32 to index
    %c0_26 = arith.constant 0 : index
    %35 = vector.load %arg12[%34, %c0_26] : memref<8x32xf32, #tpu.memory_space<vmem>>, vector<1x32xf32>
    tpu.vector_store %arg12[%34, %c0_26], %33 {strides = array<i32>} : memref<8x32xf32, #tpu.memory_space<vmem>>, vector<1x32xf32>,
    %36 = arith.addf %25, %33 : vector<1x32xf32>
    %37 = arith.mulf %33, %33 : vector<1x32xf32>
    %38 = arith.addf %27, %37 : vector<1x32xf32>
    %c2_i32 = arith.constant 2 : i32
    %39 = arith.index_cast %c2_i32 : i32 to index
    %c0_27 = arith.constant 0 : index
    %40 = vector.load %arg11[%39, %c0_27] : memref<8x32xf32, #tpu.memory_space<vmem>>, vector<1x32xf32>
    %c0_28 = arith.constant 0 : index
    %c0_29 = arith.constant 0 : index
    %41 = vector.load %arg5[%c0_28, %c0_29] : memref<32x32xf32, #tpu.memory_space<vmem>>, vector<32x32xf32>
    %cst_30 = arith.constant dense<0.000000e+00> : vector<1x32xf32>
    %42 = tpu.matmul %33, %41, %cst_30 {dimension_numbers = #tpu.dot_dimension_numbers<[1], [0], [0], [1], [0, 0, 1, 1], [], []>} : vector<1x32xf32>, vector<32x32xf32>, vector<1x32xf32> -> vector<1x32xf32>
    %43 = arith.addf %40, %42 : vector<1x32xf32>
    %44 = math.tanh %43 : vector<1x32xf32>
    %45 = arith.index_cast %c2_i32 : i32 to index
    %c0_31 = arith.constant 0 : index
    %46 = vector.load %arg12[%45, %c0_31] : memref<8x32xf32, #tpu.memory_space<vmem>>, vector<1x32xf32>
    tpu.vector_store %arg12[%45, %c0_31], %44 {strides = array<i32>} : memref<8x32xf32, #tpu.memory_space<vmem>>, vector<1x32xf32>,
    %47 = arith.addf %36, %44 : vector<1x32xf32>
    %48 = arith.mulf %44, %44 : vector<1x32xf32>
    %49 = arith.addf %38, %48 : vector<1x32xf32>
    %c3_i32 = arith.constant 3 : i32
    %50 = arith.index_cast %c3_i32 : i32 to index
    %c0_32 = arith.constant 0 : index
    %51 = vector.load %arg11[%50, %c0_32] : memref<8x32xf32, #tpu.memory_space<vmem>>, vector<1x32xf32>
    %c0_33 = arith.constant 0 : index
    %c0_34 = arith.constant 0 : index
    %52 = vector.load %arg5[%c0_33, %c0_34] : memref<32x32xf32, #tpu.memory_space<vmem>>, vector<32x32xf32>
    %cst_35 = arith.constant dense<0.000000e+00> : vector<1x32xf32>
    %53 = tpu.matmul %44, %52, %cst_35 {dimension_numbers = #tpu.dot_dimension_numbers<[1], [0], [0], [1], [0, 0, 1, 1], [], []>} : vector<1x32xf32>, vector<32x32xf32>, vector<1x32xf32> -> vector<1x32xf32>
    %54 = arith.addf %51, %53 : vector<1x32xf32>
    %55 = math.tanh %54 : vector<1x32xf32>
    %56 = arith.index_cast %c3_i32 : i32 to index
    %c0_36 = arith.constant 0 : index
    %57 = vector.load %arg12[%56, %c0_36] : memref<8x32xf32, #tpu.memory_space<vmem>>, vector<1x32xf32>
    tpu.vector_store %arg12[%56, %c0_36], %55 {strides = array<i32>} : memref<8x32xf32, #tpu.memory_space<vmem>>, vector<1x32xf32>,
    %58 = arith.addf %47, %55 : vector<1x32xf32>
    %59 = arith.mulf %55, %55 : vector<1x32xf32>
    %60 = arith.addf %49, %59 : vector<1x32xf32>
    %c4_i32 = arith.constant 4 : i32
    %61 = arith.index_cast %c4_i32 : i32 to index
    %c0_37 = arith.constant 0 : index
    %62 = vector.load %arg11[%61, %c0_37] : memref<8x32xf32, #tpu.memory_space<vmem>>, vector<1x32xf32>
    %c0_38 = arith.constant 0 : index
    %c0_39 = arith.constant 0 : index
    %63 = vector.load %arg5[%c0_38, %c0_39] : memref<32x32xf32, #tpu.memory_space<vmem>>, vector<32x32xf32>
    %cst_40 = arith.constant dense<0.000000e+00> : vector<1x32xf32>
    %64 = tpu.matmul %55, %63, %cst_40 {dimension_numbers = #tpu.dot_dimension_numbers<[1], [0], [0], [1], [0, 0, 1, 1], [], []>} : vector<1x32xf32>, vector<32x32xf32>, vector<1x32xf32> -> vector<1x32xf32>
    %65 = arith.addf %62, %64 : vector<1x32xf32>
    %66 = math.tanh %65 : vector<1x32xf32>
    %67 = arith.index_cast %c4_i32 : i32 to index
    %c0_41 = arith.constant 0 : index
    %68 = vector.load %arg12[%67, %c0_41] : memref<8x32xf32, #tpu.memory_space<vmem>>, vector<1x32xf32>
    tpu.vector_store %arg12[%67, %c0_41], %66 {strides = array<i32>} : memref<8x32xf32, #tpu.memory_space<vmem>>, vector<1x32xf32>,
    %69 = arith.addf %58, %66 : vector<1x32xf32>
    %70 = arith.mulf %66, %66 : vector<1x32xf32>
    %71 = arith.addf %60, %70 : vector<1x32xf32>
    %c5_i32 = arith.constant 5 : i32
    %72 = arith.index_cast %c5_i32 : i32 to index
    %c0_42 = arith.constant 0 : index
    %73 = vector.load %arg11[%72, %c0_42] : memref<8x32xf32, #tpu.memory_space<vmem>>, vector<1x32xf32>
    %c0_43 = arith.constant 0 : index
    %c0_44 = arith.constant 0 : index
    %74 = vector.load %arg5[%c0_43, %c0_44] : memref<32x32xf32, #tpu.memory_space<vmem>>, vector<32x32xf32>
    %cst_45 = arith.constant dense<0.000000e+00> : vector<1x32xf32>
    %75 = tpu.matmul %66, %74, %cst_45 {dimension_numbers = #tpu.dot_dimension_numbers<[1], [0], [0], [1], [0, 0, 1, 1], [], []>} : vector<1x32xf32>, vector<32x32xf32>, vector<1x32xf32> -> vector<1x32xf32>
    %76 = arith.addf %73, %75 : vector<1x32xf32>
    %77 = math.tanh %76 : vector<1x32xf32>
    %78 = arith.index_cast %c5_i32 : i32 to index
    %c0_46 = arith.constant 0 : index
    %79 = vector.load %arg12[%78, %c0_46] : memref<8x32xf32, #tpu.memory_space<vmem>>, vector<1x32xf32>
    tpu.vector_store %arg12[%78, %c0_46], %77 {strides = array<i32>} : memref<8x32xf32, #tpu.memory_space<vmem>>, vector<1x32xf32>,
    %80 = arith.addf %69, %77 : vector<1x32xf32>
    %81 = arith.mulf %77, %77 : vector<1x32xf32>
    %82 = arith.addf %71, %81 : vector<1x32xf32>
    %c6_i32 = arith.constant 6 : i32
    %83 = arith.index_cast %c6_i32 : i32 to index
    %c0_47 = arith.constant 0 : index
    %84 = vector.load %arg11[%83, %c0_47] : memref<8x32xf32, #tpu.memory_space<vmem>>, vector<1x32xf32>
    %c0_48 = arith.constant 0 : index
    %c0_49 = arith.constant 0 : index
    %85 = vector.load %arg5[%c0_48, %c0_49] : memref<32x32xf32, #tpu.memory_space<vmem>>, vector<32x32xf32>
    %cst_50 = arith.constant dense<0.000000e+00> : vector<1x32xf32>
    %86 = tpu.matmul %77, %85, %cst_50 {dimension_numbers = #tpu.dot_dimension_numbers<[1], [0], [0], [1], [0, 0, 1, 1], [], []>} : vector<1x32xf32>, vector<32x32xf32>, vector<1x32xf32> -> vector<1x32xf32>
    %87 = arith.addf %84, %86 : vector<1x32xf32>
    %88 = math.tanh %87 : vector<1x32xf32>
    %89 = arith.index_cast %c6_i32 : i32 to index
    %c0_51 = arith.constant 0 : index
    %90 = vector.load %arg12[%89, %c0_51] : memref<8x32xf32, #tpu.memory_space<vmem>>, vector<1x32xf32>
    tpu.vector_store %arg12[%89, %c0_51], %88 {strides = array<i32>} : memref<8x32xf32, #tpu.memory_space<vmem>>, vector<1x32xf32>,
    %91 = arith.addf %80, %88 : vector<1x32xf32>
    %92 = arith.mulf %88, %88 : vector<1x32xf32>
    %93 = arith.addf %82, %92 : vector<1x32xf32>
    %c7_i32 = arith.constant 7 : i32
    %94 = arith.index_cast %c7_i32 : i32 to index
    %c0_52 = arith.constant 0 : index
    %95 = vector.load %arg11[%94, %c0_52] : memref<8x32xf32, #tpu.memory_space<vmem>>, vector<1x32xf32>
    %c0_53 = arith.constant 0 : index
    %c0_54 = arith.constant 0 : index
    %96 = vector.load %arg5[%c0_53, %c0_54] : memref<32x32xf32, #tpu.memory_space<vmem>>, vector<32x32xf32>
    %cst_55 = arith.constant dense<0.000000e+00> : vector<1x32xf32>
    %97 = tpu.matmul %88, %96, %cst_55 {dimension_numbers = #tpu.dot_dimension_numbers<[1], [0], [0], [1], [0, 0, 1, 1], [], []>} : vector<1x32xf32>, vector<32x32xf32>, vector<1x32xf32> -> vector<1x32xf32>
    %98 = arith.addf %95, %97 : vector<1x32xf32>
    %99 = math.tanh %98 : vector<1x32xf32>
    %100 = arith.index_cast %c7_i32 : i32 to index
    %c0_56 = arith.constant 0 : index
    %101 = vector.load %arg12[%100, %c0_56] : memref<8x32xf32, #tpu.memory_space<vmem>>, vector<1x32xf32>
    tpu.vector_store %arg12[%100, %c0_56], %99 {strides = array<i32>} : memref<8x32xf32, #tpu.memory_space<vmem>>, vector<1x32xf32>,
    %102 = arith.addf %91, %99 : vector<1x32xf32>
    %103 = arith.mulf %99, %99 : vector<1x32xf32>
    %104 = arith.addf %93, %103 : vector<1x32xf32>
    %c8_i32 = arith.constant 8 : i32
    %cst_57 = arith.constant 1.250000e-01 : f32
    %105 = vector.broadcast %cst_57 : f32 to vector<1x32xf32>
    %106 = arith.mulf %102, %105 : vector<1x32xf32>
    %cst_58 = arith.constant 1.250000e-01 : f32
    %107 = vector.broadcast %cst_58 : f32 to vector<1x32xf32>
    %108 = arith.mulf %104, %107 : vector<1x32xf32>
    %109 = arith.mulf %106, %106 : vector<1x32xf32>
    %110 = arith.subf %108, %109 : vector<1x32xf32>
    %c0_59 = arith.constant 0 : index
    %c0_60 = arith.constant 0 : index
    %111 = vector.load %arg12[%c0_59, %c0_60] : memref<8x32xf32, #tpu.memory_space<vmem>>, vector<8x32xf32>
    %112 = vector.broadcast %106 : vector<1x32xf32> to vector<8x32xf32>
    %113 = arith.subf %111, %112 : vector<8x32xf32>
    %cst_61 = arith.constant 9.99999974E-6 : f32
    %114 = vector.broadcast %cst_61 : f32 to vector<1x32xf32>
    %115 = arith.addf %110, %114 : vector<1x32xf32>
    %116 = math.rsqrt %115 : vector<1x32xf32>
    %117 = vector.broadcast %116 : vector<1x32xf32> to vector<8x32xf32>
    %118 = arith.mulf %113, %117 : vector<8x32xf32>
    %c0_62 = arith.constant 0 : index
    %c0_63 = arith.constant 0 : index
    %119 = vector.load %arg7[%c0_62, %c0_63] : memref<1x32xf32, #tpu.memory_space<vmem>>, vector<1x32xf32>
    %120 = vector.broadcast %119 : vector<1x32xf32> to vector<8x32xf32>
    %121 = arith.mulf %118, %120 : vector<8x32xf32>
    %c0_64 = arith.constant 0 : index
    %c0_65 = arith.constant 0 : index
    %122 = vector.load %arg8[%c0_64, %c0_65] : memref<1x32xf32, #tpu.memory_space<vmem>>, vector<1x32xf32>
    %123 = vector.broadcast %122 : vector<1x32xf32> to vector<8x32xf32>
    %124 = arith.addf %121, %123 : vector<8x32xf32>
    %cst_66 = arith.constant 0.000000e+00 : f32
    %125 = vector.broadcast %cst_66 : f32 to vector<8x32xf32>
    %126 = arith.maximumf %124, %125 : vector<8x32xf32>
    %c0_67 = arith.constant 0 : index
    %c0_68 = arith.constant 0 : index
    %127 = vector.load %arg9[%c0_67, %c0_68] : memref<32x1xf32, #tpu.memory_space<vmem>>, vector<32x1xf32>
    %cst_69 = arith.constant dense<0.000000e+00> : vector<8x1xf32>
    %128 = tpu.matmul %126, %127, %cst_69 {dimension_numbers = #tpu.dot_dimension_numbers<[1], [0], [0], [1], [0, 0, 1, 1], [], []>} : vector<8x32xf32>, vector<32x1xf32>, vector<8x1xf32> -> vector<8x1xf32>
    %c0_70 = arith.constant 0 : index
    %c0_71 = arith.constant 0 : index
    %129 = vector.load %arg10[%c0_70, %c0_71] : memref<8x1xf32, #tpu.memory_space<vmem>>, vector<8x1xf32>
    tpu.vector_store %arg10[%c0_70, %c0_71], %128 {strides = array<i32>} : memref<8x1xf32, #tpu.memory_space<vmem>>, vector<8x1xf32>,
    return
  }
}

</mosaic_0001>

<llo_original>
// kernel: tpu_custom_call.1
$region0: #{tpu_custom_call.1}
  #allocation0 [shape = 'u32[]', space=smem, size = 0x4, offset = 0x4, fixed_abs, tag = 'smem constant byte address 0x4 - core index']
  #allocation1 [shape = 'u32[144,128]{1,0:T(1,128)}', space=vmem, size = 0x12000, scoped, tag = 'internal scratch']
  #allocation2 [shape = 'f32[8,32]{1,0:T(8,128)}', space=vmem, size = 0x1000, scoped, tag = 'scratch operand']
  #allocation3 [shape = 'f32[8,32]{1,0:T(8,128)}', space=vmem, size = 0x1000, scoped, tag = 'scratch operand']
  %s0 = inlined_call_operand.vmem [shape: f32[32,4], index: 0, kind: input, shape index: {}]
  %s1 = inlined_call_operand.hbm [shape: f32[8,32], index: 1, kind: input, shape index: {}]
  %s2 = inlined_call_operand.vmem [shape: f32[4,32], index: 2, kind: input, shape index: {}]
  %s3 = inlined_call_operand.vmem [shape: f32[1,32], index: 3, kind: input, shape index: {}]
  %s4 = inlined_call_operand.vmem [shape: f32[32,32], index: 4, kind: input, shape index: {}]
  %s5 = inlined_call_operand.vmem [shape: f32[32,32], index: 5, kind: input, shape index: {}]
  %s6 = inlined_call_operand.vmem [shape: f32[1,32], index: 6, kind: input, shape index: {}]
  %s7 = inlined_call_operand.vmem [shape: f32[1,32], index: 7, kind: input, shape index: {}]
  %s8 = inlined_call_operand.vmem [shape: f32[1,32], index: 8, kind: input, shape index: {}]
  %s9 = inlined_call_operand.vmem [shape: f32[32,1], index: 9, kind: input, shape index: {}]
  %s10 = inlined_call_operand.vmem [shape: f32[8,1], index: 10, kind: output, shape index: {}]
  %s11 = sld [smem:[#allocation0]]
  $region54: #{tpu_custom_call.1} parent=0
    _
  %s13 = ssub.s32 1, %s11
  %s14 = scalar_select 0, %s13, %s11
  $region1: #{tpu_custom_call.1} parent=0
    #allocation4 [shape = 'u8[4096]{0}', space=vmem, size = 0x1000, scoped, tag = 'input window, operand 1, single buffered']
    #allocation5 [shape = 's32[1]{0}', space=sflag, size = 0x4, scoped, tag = 'scoped memory for tpu_custom_call.1']
    %15 = vsyncpa [#allocation5], 0
    // Predicated region
    $region2: #{tpu_custom_call.1} parent=1 // pred_check
      _
    $region3: #{tpu_custom_call.1} parent=1 // pred_check_branch
      %17 = sbr.rel (0) target = $region5
    $region4: #{tpu_custom_call.1} parent=1 // pred_region
      _
    $region5: #{tpu_custom_call.1} parent=1 // pred_fallthru
      _
    // Predicated region
    $region6: #{tpu_custom_call.1} parent=1 // pred_check
      _
    $region7: #{tpu_custom_call.1} parent=1 // pred_check_branch
      %19 = sbr.rel (0) target = $region9
    $region8: #{tpu_custom_call.1} parent=1 // pred_region
      %s21 = ssub.s32 128, 128
      %22 = vsyncadd [#allocation5], %s21
      %s24 = sshll.u32 [#allocation4], 4
      %s25 = int_to_ptr.vmem [resolvable:$true] %s24
      %27 = dma.hbm_to_vmem [thread:$0]  %s1, 128, %s25, [#allocation5]
    $region9: #{tpu_custom_call.1} parent=1 // pred_fallthru
      _
    // Predicated region
    $region10: #{tpu_custom_call.1} parent=1 // pred_check
      _
    $region11: #{tpu_custom_call.1} parent=1 // pred_check_branch
      %29 = sbr.rel (0) target = $region13
    $region12: #{tpu_custom_call.1} parent=1 // pred_region
      _
    $region13: #{tpu_custom_call.1} parent=1 // pred_fallthru
      _
    // Predicated region
    $region14: #{tpu_custom_call.1} parent=1 // pred_check
      _
    $region15: #{tpu_custom_call.1} parent=1 // pred_check_branch
      %31 = sbr.rel (0) target = $region17
    $region16: #{tpu_custom_call.1} parent=1 // pred_region
      _
    $region17: #{tpu_custom_call.1} parent=1 // pred_fallthru
      _
    // Predicated region
    $region18: #{tpu_custom_call.1} parent=1 // pred_check
      _
    $region19: #{tpu_custom_call.1} parent=1 // pred_check_branch
      %33 = sbr.rel (0) target = $region21
    $region20: #{tpu_custom_call.1} parent=1 // pred_region
      _
    $region21: #{tpu_custom_call.1} parent=1 // pred_fallthru
      _
    // Predicated region
    $region22: #{tpu_custom_call.1} parent=1 // pred_check
      _
    $region23: #{tpu_custom_call.1} parent=1 // pred_check_branch
      %35 = sbr.rel (0) target = $region25
    $region24: #{tpu_custom_call.1} parent=1 // pred_region
      _
    $region25: #{tpu_custom_call.1} parent=1 // pred_fallthru
      _
    // Predicated region
    $region26: #{tpu_custom_call.1} parent=1 // pred_check
      _
    $region27: #{tpu_custom_call.1} parent=1 // pred_check_branch
      %37 = sbr.rel (0) target = $region29
    $region28: #{tpu_custom_call.1} parent=1 // pred_region
      _
    $region29: #{tpu_custom_call.1} parent=1 // pred_fallthru
      _
    // Predicated region
    $region30: #{tpu_custom_call.1} parent=1 // pred_check
      _
    $region31: #{tpu_custom_call.1} parent=1 // pred_check_branch
      %39 = sbr.rel (0) target = $region33
    $region32: #{tpu_custom_call.1} parent=1 // pred_region
      _
    $region33: #{tpu_custom_call.1} parent=1 // pred_fallthru
      _
    // Predicated region
    $region34: #{tpu_custom_call.1} parent=1 // pred_check
      _
    $region35: #{tpu_custom_call.1} parent=1 // pred_check_branch
      %41 = sbr.rel (0) target = $region37
    $region36: #{tpu_custom_call.1} parent=1 // pred_region
      _
    $region37: #{tpu_custom_call.1} parent=1 // pred_fallthru
      _
    // Predicated region
    $region38: #{tpu_custom_call.1} parent=1 // pred_check
      _
    $region39: #{tpu_custom_call.1} parent=1 // pred_check_branch
      %43 = sbr.rel (0) target = $region41
    $region40: #{tpu_custom_call.1} parent=1 // pred_region
      _
    $region41: #{tpu_custom_call.1} parent=1 // pred_fallthru
      _
    // Predicated region
    $region42: #{tpu_custom_call.1} parent=1 // pred_check
      _
    $region43: #{tpu_custom_call.1} parent=1 // pred_check_branch
      %45 = sbr.rel (0) target = $region45
    $region44: #{tpu_custom_call.1} parent=1 // pred_region
      %46 = dma.done [#allocation5], 128
    $region45: #{tpu_custom_call.1} parent=1 // pred_fallthru
      _
    %v47 = vld [vmem:[%s0] sm:$0xff]
    %v48 = vld [vmem:[%s0 + $0x8] sm:$0xff]
    %v49 = vld [vmem:[%s0 + $0x10] sm:$0xff]
    %v50 = vld [vmem:[%s0 + $0x18] sm:$0xff]
    %v51 = vld [vmem:[%s2] sm:$0xf]
    %vm52 = vcmask 31744
    %v54 = vsel %vm52, %v47, 0
    %v57 = vsel %vm52, %v48, 0
    %v60 = vsel %vm52, %v49, 0
    %v63 = vsel %vm52, %v50, 0
    %vm65 = vcmask 1043456
    %v67 = vsel %vm65, %v51, 0
    %69 = vmatprep.subr.mxu0 0.0
    %70 = vmatpush1.msra.mxu0 0.0
    %71 = vmatprep.subr.mxu0 0.0
    %72 = vmatpush1.msra.mxu0 0.0
    %73 = vmatprep.subr.mxu0 0.0
    %74 = vmatpush1.msra.mxu0 0.0
    %75 = vmatprep.subr.mxu0 0.0
    %76 = vmatpush1.msra.mxu0 0.0
    %77 = vmatprep.subr.mxu0 0.0
    %78 = vmatpush1.msra.mxu0 0.0
    %79 = vmatprep.subr.mxu0 0.0
    %80 = vmatpush1.msra.mxu0 0.0
    %81 = vmatprep.subr.mxu0 0.0
    %82 = vmatpush1.msra.mxu0 0.0
    %83 = vmatprep.subr.mxu0 0.0
    %84 = vmatpush1.msra.mxu0 0.0
    %85 = vmatprep.subr.mxu0 0.0
    %86 = vmatpush1.msra.mxu0 0.0
    %87 = vmatprep.subr.mxu0 0.0
    %88 = vmatpush1.msra.mxu0 0.0
    %89 = vmatprep.subr.mxu0 0.0
    %90 = vmatpush1.msra.mxu0 0.0
    %91 = vmatprep.subr.mxu0 0.0
    %92 = vmatpush1.msra.mxu0 0.0
    %93 = vmatprep.subr.mxu0 0.0
    %94 = vmatpush1.msra.mxu0 0.0
    %95 = vmatprep.subr.mxu0 0.0
    %96 = vmatpush1.msra.mxu0 0.0
    %97 = vmatprep.subr.mxu0 0.0
    %98 = vmatpush1.msra.mxu0 0.0
    %99 = vmatprep.subr.mxu0 0.0
    %100 = vmatpush1.msra.mxu0 %v67
    %101 = vmatprep.subr.mxu0 0.0
    %102 = vmatpush2.msra.mxu0 0.0
    %103 = vmatprep.subr.mxu0 0.0
    %104 = vmatpush2.msra.mxu0 0.0
    %105 = vmatprep.subr.mxu0 0.0
    %106 = vmatpush2.msra.mxu0 0.0
    %107 = vmatprep.subr.mxu0 0.0
    %108 = vmatpush2.msra.mxu0 0.0
    %109 = vmatprep.subr.mxu0 0.0
    %110 = vmatpush2.msra.mxu0 0.0
    %111 = vmatprep.subr.mxu0 0.0
    %112 = vmatpush2.msra.mxu0 0.0
    %113 = vmatprep.subr.mxu0 0.0
    %114 = vmatpush2.msra.mxu0 0.0
    %115 = vmatprep.subr.mxu0 0.0
    %116 = vmatpush2.msra.mxu0 0.0
    %117 = vmatprep.subr.mxu0 0.0
    %118 = vmatpush2.msra.mxu0 0.0
    %119 = vmatprep.subr.mxu0 0.0
    %120 = vmatpush2.msra.mxu0 0.0
    %121 = vmatprep.subr.mxu0 0.0
    %122 = vmatpush2.msra.mxu0 0.0
    %123 = vmatprep.subr.mxu0 0.0
    %124 = vmatpush2.msra.mxu0 0.0
    %125 = vmatprep.subr.mxu0 0.0
    %126 = vmatpush2.msra.mxu0 0.0
    %127 = vmatprep.subr.mxu0 0.0
    %128 = vmatpush2.msra.mxu0 0.0
    %129 = vmatprep.subr.mxu0 0.0
    %130 = vmatpush2.msra.mxu0 0.0
    %131 = vmatprep.subr.mxu0 0.0
    %132 = vmatpush2.msra.mxu0 0.0
    %133 = vmatprep.mubr.f32.mxu0 0.0
    %134 = vmatmul.mubr.f32.gmra.mxu0 %v54
    %v135 = vpop.f32.mrf.mxu0
    %v136 = vadd.f32 0.0, %v135
    %v137 = vpop.f32.mrf.mxu0
    %138 = vmatprep.mubr.f32.mxu0 0.0
    %139 = vmatmul.mubr.f32.gmra.mxu0 %v57
    %v140 = vpop.f32.mrf.mxu0
    %v141 = vadd.f32 0.0, %v140
    %v142 = vpop.f32.mrf.mxu0
    %143 = vmatprep.mubr.f32.mxu0 0.0
    %144 = vmatmul.mubr.f32.gmra.mxu0 %v60
    %v145 = vpop.f32.mrf.mxu0
    %v146 = vadd.f32 0.0, %v145
    %v147 = vpop.f32.mrf.mxu0
    %148 = vmatprep.mubr.f32.mxu0 0.0
    %149 = vmatmul.mubr.f32.gmra.mxu0 %v63
    %v150 = vpop.f32.mrf.mxu0
    %v151 = vadd.f32 0.0, %v150
    %v152 = vpop.f32.mrf.mxu0
    %153 = vdwg.mxu0
    %v154 = vld [vmem:[#allocation4] sm:$0xff]
    %v155 = vld [vmem:[%s3] sm:$0x1]
    %v157 = vlaneseq
    %v158 = vshrl.u32 %v157, 7
    %v159 = vsub.s32 0, %v158
    %v160 = vrot.slane %v155, %v159
    %vm162 = vcmask 261120
    %v164 = vsel %vm162, %v154, 0
    %166 = vmatprep.subr.mxu0 0.0
    %167 = vmatpush1.msra.mxu0 0.0
    %168 = vmatprep.subr.mxu0 0.0
    %169 = vmatpush1.msra.mxu0 0.0
    %170 = vmatprep.subr.mxu0 0.0
    %171 = vmatpush1.msra.mxu0 0.0
    %172 = vmatprep.subr.mxu0 0.0
    %173 = vmatpush1.msra.mxu0 0.0
    %174 = vmatprep.subr.mxu0 0.0
    %175 = vmatpush1.msra.mxu0 0.0
    %176 = vmatprep.subr.mxu0 0.0
    %177 = vmatpush1.msra.mxu0 0.0
    %178 = vmatprep.subr.mxu0 0.0
    %179 = vmatpush1.msra.mxu0 0.0
    %180 = vmatprep.subr.mxu0 0.0
    %181 = vmatpush1.msra.mxu0 0.0
    %182 = vmatprep.subr.mxu0 0.0
    %183 = vmatpush1.msra.mxu0 0.0
    %184 = vmatprep.subr.mxu0 0.0
    %185 = vmatpush1.msra.mxu0 0.0
    %186 = vmatprep.subr.mxu0 0.0
    %187 = vmatpush1.msra.mxu0 0.0
    %188 = vmatprep.subr.mxu0 0.0
    %189 = vmatpush1.msra.mxu0 0.0
    %190 = vmatprep.subr.mxu0 0.0
    %191 = vmatpush1.msra.mxu0 %v151
    %192 = vmatprep.subr.mxu0 0.0
    %193 = vmatpush1.msra.mxu0 %v146
    %194 = vmatprep.subr.mxu0 0.0
    %195 = vmatpush1.msra.mxu0 %v141
    %196 = vmatprep.subr.mxu0 0.0
    %197 = vmatpush1.msra.mxu0 %v136
    %198 = vmatprep.subr.mxu0 0.0
    %199 = vmatpush2.msra.mxu0 0.0
    %200 = vmatprep.subr.mxu0 0.0
    %201 = vmatpush2.msra.mxu0 0.0
    %202 = vmatprep.subr.mxu0 0.0
    %203 = vmatpush2.msra.mxu0 0.0
    %204 = vmatprep.subr.mxu0 0.0
    %205 = vmatpush2.msra.mxu0 0.0
    %206 = vmatprep.subr.mxu0 0.0
    %207 = vmatpush2.msra.mxu0 0.0
    %208 = vmatprep.subr.mxu0 0.0
    %209 = vmatpush2.msra.mxu0 0.0
    %210 = vmatprep.subr.mxu0 0.0
    %211 = vmatpush2.msra.mxu0 0.0
    %212 = vmatprep.subr.mxu0 0.0
    %213 = vmatpush2.msra.mxu0 0.0
    %214 = vmatprep.subr.mxu0 0.0
    %215 = vmatpush2.msra.mxu0 0.0
    %216 = vmatprep.subr.mxu0 0.0
    %217 = vmatpush2.msra.mxu0 0.0
    %218 = vmatprep.subr.mxu0 0.0
    %219 = vmatpush2.msra.mxu0 0.0
    %220 = vmatprep.subr.mxu0 0.0
    %221 = vmatpush2.msra.mxu0 0.0
    %222 = vmatprep.subr.mxu0 0.0
    %223 = vmatpush2.msra.mxu0 0.0
    %224 = vmatprep.subr.mxu0 0.0
    %225 = vmatpush2.msra.mxu0 0.0
    %226 = vmatprep.subr.mxu0 0.0
    %227 = vmatpush2.msra.mxu0 0.0
    %228 = vmatprep.subr.mxu0 0.0
    %229 = vmatpush2.msra.mxu0 0.0
    %230 = vmatprep.mubr.f32.mxu0 0.0
    %231 = vmatmul.mubr.f32.gmra.mxu0 %v164
    %v232 = vpop.f32.mrf.mxu0
    %v233 = vadd.f32 %v160, %v232
    %v234 = vpop.f32.mrf.mxu0
    %235 = vdwg.mxu0
    %v236 = vmax.f32 %v233, 0.0
    %v237 = vld [vmem:[%s4] sm:$0xff]
    %v238 = vld [vmem:[%s4 + $0x8] sm:$0xff]
    %v239 = vld [vmem:[%s4 + $0x10] sm:$0xff]
    %v240 = vld [vmem:[%s4 + $0x18] sm:$0xff]
    %v241 = vld [vmem:[%s6] sm:$0x1]
    %v243 = vlaneseq
    %v244 = vshrl.u32 %v243, 7
    %v245 = vsub.s32 0, %v244
    %v246 = vrot.slane %v241, %v245
    %v249 = vsel %vm162, %v236, 0
    %251 = vmatprep.subr.mxu0 0.0
    %252 = vmatpush1.msra.mxu0 0.0
    %253 = vmatprep.subr.mxu0 0.0
    %254 = vmatpush1.msra.mxu0 0.0
    %255 = vmatprep.subr.mxu0 0.0
    %256 = vmatpush1.msra.mxu0 0.0
    %257 = vmatprep.subr.mxu0 0.0
    %258 = vmatpush1.msra.mxu0 0.0
    %259 = vmatprep.subr.mxu0 0.0
    %260 = vmatpush1.msra.mxu0 0.0
    %261 = vmatprep.subr.mxu0 0.0
    %262 = vmatpush1.msra.mxu0 0.0
    %263 = vmatprep.subr.mxu0 0.0
    %264 = vmatpush1.msra.mxu0 0.0
    %265 = vmatprep.subr.mxu0 0.0
    %266 = vmatpush1.msra.mxu0 0.0
    %267 = vmatprep.subr.mxu0 0.0
    %268 = vmatpush1.msra.mxu0 0.0
    %269 = vmatprep.subr.mxu0 0.0
    %270 = vmatpush1.msra.mxu0 0.0
    %271 = vmatprep.subr.mxu0 0.0
    %272 = vmatpush1.msra.mxu0 0.0
    %273 = vmatprep.subr.mxu0 0.0
    %274 = vmatpush1.msra.mxu0 0.0
    %275 = vmatprep.subr.mxu0 0.0
    %276 = vmatpush1.msra.mxu0 %v240
    %277 = vmatprep.subr.mxu0 0.0
    %278 = vmatpush1.msra.mxu0 %v239
    %279 = vmatprep.subr.mxu0 0.0
    %280 = vmatpush1.msra.mxu0 %v238
    %281 = vmatprep.subr.mxu0 0.0
    %282 = vmatpush1.msra.mxu0 %v237
    %283 = vmatprep.subr.mxu0 0.0
    %284 = vmatpush2.msra.mxu0 0.0
    %285 = vmatprep.subr.mxu0 0.0
    %286 = vmatpush2.msra.mxu0 0.0
    %287 = vmatprep.subr.mxu0 0.0
    %288 = vmatpush2.msra.mxu0 0.0
    %289 = vmatprep.subr.mxu0 0.0
    %290 = vmatpush2.msra.mxu0 0.0
    %291 = vmatprep.subr.mxu0 0.0
    %292 = vmatpush2.msra.mxu0 0.0
    %293 = vmatprep.subr.mxu0 0.0
    %294 = vmatpush2.msra.mxu0 0.0
    %295 = vmatprep.subr.mxu0 0.0
    %296 = vmatpush2.msra.mxu0 0.0
    %297 = vmatprep.subr.mxu0 0.0
    %298 = vmatpush2.msra.mxu0 0.0
    %299 = vmatprep.subr.mxu0 0.0
    %300 = vmatpush2.msra.mxu0 0.0
    %301 = vmatprep.subr.mxu0 0.0
    %302 = vmatpush2.msra.mxu0 0.0
    %303 = vmatprep.subr.mxu0 0.0
    %304 = vmatpush2.msra.mxu0 0.0
    %305 = vmatprep.subr.mxu0 0.0
    %306 = vmatpush2.msra.mxu0 0.0
    %307 = vmatprep.subr.mxu0 0.0
    %308 = vmatpush2.msra.mxu0 0.0
    %309 = vmatprep.subr.mxu0 0.0
    %310 = vmatpush2.msra.mxu0 0.0
    %311 = vmatprep.subr.mxu0 0.0
    %312 = vmatpush2.msra.mxu0 0.0
    %313 = vmatprep.subr.mxu0 0.0
    %314 = vmatpush2.msra.mxu0 0.0
    %315 = vmatprep.mubr.f32.mxu0 0.0
    %316 = vmatmul.mubr.f32.gmra.mxu0 %v249
    %v317 = vpop.f32.mrf.mxu0
    %v318 = vadd.f32 %v246, %v317
    %v319 = vpop.f32.mrf.mxu0
    %320 = vdwg.mxu0
    %321 = vst.msk [vmem:[#allocation2] sm:$0xff] %vm162, %v318
    %v322 = vld [vmem:[#allocation2] sm:$0x1]
    %v323 = vld [vmem:[%s5] sm:$0xff]
    %v324 = vld [vmem:[%s5 + $0x8] sm:$0xff]
    %v325 = vld [vmem:[%s5 + $0x10] sm:$0xff]
    %v326 = vld [vmem:[%s5 + $0x18] sm:$0xff]
    %v328 = vsel %vm162, 0.0, 0
    %330 = vmatprep.subr.mxu0 0.0
    %331 = vmatpush1.msra.mxu0 0.0
    %332 = vmatprep.subr.mxu0 0.0
    %333 = vmatpush1.msra.mxu0 0.0
    %334 = vmatprep.subr.mxu0 0.0
    %335 = vmatpush1.msra.mxu0 0.0
    %336 = vmatprep.subr.mxu0 0.0
    %337 = vmatpush1.msra.mxu0 0.0
    %338 = vmatprep.subr.mxu0 0.0
    %339 = vmatpush1.msra.mxu0 0.0
    %340 = vmatprep.subr.mxu0 0.0
    %341 = vmatpush1.msra.mxu0 0.0
    %342 = vmatprep.subr.mxu0 0.0
    %343 = vmatpush1.msra.mxu0 0.0
    %344 = vmatprep.subr.mxu0 0.0
    %345 = vmatpush1.msra.mxu0 0.0
    %346 = vmatprep.subr.mxu0 0.0
    %347 = vmatpush1.msra.mxu0 0.0
    %348 = vmatprep.subr.mxu0 0.0
    %349 = vmatpush1.msra.mxu0 0.0
    %350 = vmatprep.subr.mxu0 0.0
    %351 = vmatpush1.msra.mxu0 0.0
    %352 = vmatprep.subr.mxu0 0.0
    %353 = vmatpush1.msra.mxu0 0.0
    %354 = vmatprep.subr.mxu0 0.0
    %355 = vmatpush1.msra.mxu0 %v326
    %356 = vmatprep.subr.mxu0 0.0
    %357 = vmatpush1.msra.mxu0 %v325
    %358 = vmatprep.subr.mxu0 0.0
    %359 = vmatpush1.msra.mxu0 %v324
    %360 = vmatprep.subr.mxu0 0.0
    %361 = vmatpush1.msra.mxu0 %v323
    %362 = vmatprep.subr.mxu0 0.0
    %363 = vmatpush2.msra.mxu0 0.0
    %364 = vmatprep.subr.mxu0 0.0
    %365 = vmatpush2.msra.mxu0 0.0
    %366 = vmatprep.subr.mxu0 0.0
    %367 = vmatpush2.msra.mxu0 0.0
    %368 = vmatprep.subr.mxu0 0.0
    %369 = vmatpush2.msra.mxu0 0.0
    %370 = vmatprep.subr.mxu0 0.0
    %371 = vmatpush2.msra.mxu0 0.0
    %372 = vmatprep.subr.mxu0 0.0
    %373 = vmatpush2.msra.mxu0 0.0
    %374 = vmatprep.subr.mxu0 0.0
    %375 = vmatpush2.msra.mxu0 0.0
    %376 = vmatprep.subr.mxu0 0.0
    %377 = vmatpush2.msra.mxu0 0.0
    %378 = vmatprep.subr.mxu0 0.0
    %379 = vmatpush2.msra.mxu0 0.0
    %380 = vmatprep.subr.mxu0 0.0
    %381 = vmatpush2.msra.mxu0 0.0
    %382 = vmatprep.subr.mxu0 0.0
    %383 = vmatpush2.msra.mxu0 0.0
    %384 = vmatprep.subr.mxu0 0.0
    %385 = vmatpush2.msra.mxu0 0.0
    %386 = vmatprep.subr.mxu0 0.0
    %387 = vmatpush2.msra.mxu0 0.0
    %388 = vmatprep.subr.mxu0 0.0
    %389 = vmatpush2.msra.mxu0 0.0
    %390 = vmatprep.subr.mxu0 0.0
    %391 = vmatpush2.msra.mxu0 0.0
    %392 = vmatprep.subr.mxu0 0.0
    %393 = vmatpush2.msra.mxu0 0.0
    %394 = vmatprep.mubr.f32.mxu0 0.0
    %395 = vmatmul.mubr.f32.gmra.mxu0 %v328
    %v396 = vpop.f32.mrf.mxu0
    %v397 = vadd.f32 0.0, %v396
    %v398 = vpop.f32.mrf.mxu0
    %399 = vdwg.mxu0
    %v400 = vadd.f32 %v322, %v397
    %v401 = vtanh.pop %v400
    %vm402 = vcmask 253952
    %403 = vst.msk [vmem:[#allocation3] sm:$0x1] %vm402, %v401
    %v404 = vadd.f32 %v401, 0.0
    %v405 = vmul.f32 %v401, %v401
    %v406 = vadd.f32 %v405, 0.0
    %v407 = vld [vmem:[#allocation2 + $0x1] sm:$0x1]
    %v408 = vld [vmem:[%s5] sm:$0xff]
    %v409 = vld [vmem:[%s5 + $0x8] sm:$0xff]
    %v410 = vld [vmem:[%s5 + $0x10] sm:$0xff]
    %v411 = vld [vmem:[%s5 + $0x18] sm:$0xff]
    %v413 = vsel %vm162, %v401, 0
    %415 = vmatprep.subr.mxu0 0.0
    %416 = vmatpush1.msra.mxu0 0.0
    %417 = vmatprep.subr.mxu0 0.0
    %418 = vmatpush1.msra.mxu0 0.0
    %419 = vmatprep.subr.mxu0 0.0
    %420 = vmatpush1.msra.mxu0 0.0
    %421 = vmatprep.subr.mxu0 0.0
    %422 = vmatpush1.msra.mxu0 0.0
    %423 = vmatprep.subr.mxu0 0.0
    %424 = vmatpush1.msra.mxu0 0.0
    %425 = vmatprep.subr.mxu0 0.0
    %426 = vmatpush1.msra.mxu0 0.0
    %427 = vmatprep.subr.mxu0 0.0
    %428 = vmatpush1.msra.mxu0 0.0
    %429 = vmatprep.subr.mxu0 0.0
    %430 = vmatpush1.msra.mxu0 0.0
    %431 = vmatprep.subr.mxu0 0.0
    %432 = vmatpush1.msra.mxu0 0.0
    %433 = vmatprep.subr.mxu0 0.0
    %434 = vmatpush1.msra.mxu0 0.0
    %435 = vmatprep.subr.mxu0 0.0
    %436 = vmatpush1.msra.mxu0 0.0
    %437 = vmatprep.subr.mxu0 0.0
    %438 = vmatpush1.msra.mxu0 0.0
    %439 = vmatprep.subr.mxu0 0.0
    %440 = vmatpush1.msra.mxu0 %v411
    %441 = vmatprep.subr.mxu0 0.0
    %442 = vmatpush1.msra.mxu0 %v410
    %443 = vmatprep.subr.mxu0 0.0
    %444 = vmatpush1.msra.mxu0 %v409
    %445 = vmatprep.subr.mxu0 0.0
    %446 = vmatpush1.msra.mxu0 %v408
    %447 = vmatprep.subr.mxu0 0.0
    %448 = vmatpush2.msra.mxu0 0.0
    %449 = vmatprep.subr.mxu0 0.0
    %450 = vmatpush2.msra.mxu0 0.0
    %451 = vmatprep.subr.mxu0 0.0
    %452 = vmatpush2.msra.mxu0 0.0
    %453 = vmatprep.subr.mxu0 0.0
    %454 = vmatpush2.msra.mxu0 0.0
    %455 = vmatprep.subr.mxu0 0.0
    %456 = vmatpush2.msra.mxu0 0.0
    %457 = vmatprep.subr.mxu0 0.0
    %458 = vmatpush2.msra.mxu0 0.0
    %459 = vmatprep.subr.mxu0 0.0
    %460 = vmatpush2.msra.mxu0 0.0
    %461 = vmatprep.subr.mxu0 0.0
    %462 = vmatpush2.msra.mxu0 0.0
    %463 = vmatprep.subr.mxu0 0.0
    %464 = vmatpush2.msra.mxu0 0.0
    %465 = vmatprep.subr.mxu0 0.0
    %466 = vmatpush2.msra.mxu0 0.0
    %467 = vmatprep.subr.mxu0 0.0
    %468 = vmatpush2.msra.mxu0 0.0
    %469 = vmatprep.subr.mxu0 0.0
    %470 = vmatpush2.msra.mxu0 0.0
    %471 = vmatprep.subr.mxu0 0.0
    %472 = vmatpush2.msra.mxu0 0.0
    %473 = vmatprep.subr.mxu0 0.0
    %474 = vmatpush2.msra.mxu0 0.0
    %475 = vmatprep.subr.mxu0 0.0
    %476 = vmatpush2.msra.mxu0 0.0
    %477 = vmatprep.subr.mxu0 0.0
    %478 = vmatpush2.msra.mxu0 0.0
    %479 = vmatprep.mubr.f32.mxu0 0.0
    %480 = vmatmul.mubr.f32.gmra.mxu0 %v413
    %v481 = vpop.f32.mrf.mxu0
    %v482 = vadd.f32 0.0, %v481
    %v483 = vpop.f32.mrf.mxu0
    %484 = vdwg.mxu0
    %v485 = vadd.f32 %v407, %v482
    %v486 = vtanh.pop %v485
    %487 = vst.msk [vmem:[#allocation3 + $0x1] sm:$0x1] %vm402, %v486
    %v488 = vadd.f32 %v404, %v486
    %v489 = vmul.f32 %v486, %v486
    %v490 = vadd.f32 %v406, %v489
    %v491 = vld [vmem:[#allocation2 + $0x2] sm:$0x1]
    %v492 = vld [vmem:[%s5] sm:$0xff]
    %v493 = vld [vmem:[%s5 + $0x8] sm:$0xff]
    %v494 = vld [vmem:[%s5 + $0x10] sm:$0xff]
    %v495 = vld [vmem:[%s5 + $0x18] sm:$0xff]
    %v497 = vsel %vm162, %v486, 0
    %499 = vmatprep.subr.mxu0 0.0
    %500 = vmatpush1.msra.mxu0 0.0
    %501 = vmatprep.subr.mxu0 0.0
    %502 = vmatpush1.msra.mxu0 0.0
    %503 = vmatprep.subr.mxu0 0.0
    %504 = vmatpush1.msra.mxu0 0.0
    %505 = vmatprep.subr.mxu0 0.0
    %506 = vmatpush1.msra.mxu0 0.0
    %507 = vmatprep.subr.mxu0 0.0
    %508 = vmatpush1.msra.mxu0 0.0
    %509 = vmatprep.subr.mxu0 0.0
    %510 = vmatpush1.msra.mxu0 0.0
    %511 = vmatprep.subr.mxu0 0.0
    %512 = vmatpush1.msra.mxu0 0.0
    %513 = vmatprep.subr.mxu0 0.0
    %514 = vmatpush1.msra.mxu0 0.0
    %515 = vmatprep.subr.mxu0 0.0
    %516 = vmatpush1.msra.mxu0 0.0
    %517 = vmatprep.subr.mxu0 0.0
    %518 = vmatpush1.msra.mxu0 0.0
    %519 = vmatprep.subr.mxu0 0.0
    %520 = vmatpush1.msra.mxu0 0.0
    %521 = vmatprep.subr.mxu0 0.0
    %522 = vmatpush1.msra.mxu0 0.0
    %523 = vmatprep.subr.mxu0 0.0
    %524 = vmatpush1.msra.mxu0 %v495
    %525 = vmatprep.subr.mxu0 0.0
    %526 = vmatpush1.msra.mxu0 %v494
    %527 = vmatprep.subr.mxu0 0.0
    %528 = vmatpush1.msra.mxu0 %v493
    %529 = vmatprep.subr.mxu0 0.0
    %530 = vmatpush1.msra.mxu0 %v492
    %531 = vmatprep.subr.mxu0 0.0
    %532 = vmatpush2.msra.mxu0 0.0
    %533 = vmatprep.subr.mxu0 0.0
    %534 = vmatpush2.msra.mxu0 0.0
    %535 = vmatprep.subr.mxu0 0.0
    %536 = vmatpush2.msra.mxu0 0.0
    %537 = vmatprep.subr.mxu0 0.0
    %538 = vmatpush2.msra.mxu0 0.0
    %539 = vmatprep.subr.mxu0 0.0
    %540 = vmatpush2.msra.mxu0 0.0
    %541 = vmatprep.subr.mxu0 0.0
    %542 = vmatpush2.msra.mxu0 0.0
    %543 = vmatprep.subr.mxu0 0.0
    %544 = vmatpush2.msra.mxu0 0.0
    %545 = vmatprep.subr.mxu0 0.0
    %546 = vmatpush2.msra.mxu0 0.0
    %547 = vmatprep.subr.mxu0 0.0
    %548 = vmatpush2.msra.mxu0 0.0
    %549 = vmatprep.subr.mxu0 0.0
    %550 = vmatpush2.msra.mxu0 0.0
    %551 = vmatprep.subr.mxu0 0.0
    %552 = vmatpush2.msra.mxu0 0.0
    %553 = vmatprep.subr.mxu0 0.0
    %554 = vmatpush2.msra.mxu0 0.0
    %555 = vmatprep.subr.mxu0 0.0
    %556 = vmatpush2.msra.mxu0 0.0
    %557 = vmatprep.subr.mxu0 0.0
    %558 = vmatpush2.msra.mxu0 0.0
    %559 = vmatprep.subr.mxu0 0.0
    %560 = vmatpush2.msra.mxu0 0.0
    %561 = vmatprep.subr.mxu0 0.0
    %562 = vmatpush2.msra.mxu0 0.0
    %563 = vmatprep.mubr.f32.mxu0 0.0
    %564 = vmatmul.mubr.f32.gmra.mxu0 %v497
    %v565 = vpop.f32.mrf.mxu0
    %v566 = vadd.f32 0.0, %v565
    %v567 = vpop.f32.mrf.mxu0
    %568 = vdwg.mxu0
    %v569 = vadd.f32 %v491, %v566
    %v570 = vtanh.pop %v569
    %571 = vst.msk [vmem:[#allocation3 + $0x2] sm:$0x1] %vm402, %v570
    %v572 = vadd.f32 %v488, %v570
    %v573 = vmul.f32 %v570, %v570
    %v574 = vadd.f32 %v490, %v573
    %v575 = vld [vmem:[#allocation2 + $0x3] sm:$0x1]
    %v576 = vld [vmem:[%s5] sm:$0xff]
    %v577 = vld [vmem:[%s5 + $0x8] sm:$0xff]
    %v578 = vld [vmem:[%s5 + $0x10] sm:$0xff]
    %v579 = vld [vmem:[%s5 + $0x18] sm:$0xff]
    %v581 = vsel %vm162, %v570, 0
    %583 = vmatprep.subr.mxu0 0.0
    %584 = vmatpush1.msra.mxu0 0.0
    %585 = vmatprep.subr.mxu0 0.0
    %586 = vmatpush1.msra.mxu0 0.0
    %587 = vmatprep.subr.mxu0 0.0
    %588 = vmatpush1.msra.mxu0 0.0
    %589 = vmatprep.subr.mxu0 0.0
    %590 = vmatpush1.msra.mxu0 0.0
    %591 = vmatprep.subr.mxu0 0.0
    %592 = vmatpush1.msra.mxu0 0.0
    %593 = vmatprep.subr.mxu0 0.0
    %594 = vmatpush1.msra.mxu0 0.0
    %595 = vmatprep.subr.mxu0 0.0
    %596 = vmatpush1.msra.mxu0 0.0
    %597 = vmatprep.subr.mxu0 0.0
    %598 = vmatpush1.msra.mxu0 0.0
    %599 = vmatprep.subr.mxu0 0.0
    %600 = vmatpush1.msra.mxu0 0.0
    %601 = vmatprep.subr.mxu0 0.0
    %602 = vmatpush1.msra.mxu0 0.0
    %603 = vmatprep.subr.mxu0 0.0
    %604 = vmatpush1.msra.mxu0 0.0
    %605 = vmatprep.subr.mxu0 0.0
    %606 = vmatpush1.msra.mxu0 0.0
    %607 = vmatprep.subr.mxu0 0.0
    %608 = vmatpush1.msra.mxu0 %v579
    %609 = vmatprep.subr.mxu0 0.0
    %610 = vmatpush1.msra.mxu0 %v578
    %611 = vmatprep.subr.mxu0 0.0
    %612 = vmatpush1.msra.mxu0 %v577
    %613 = vmatprep.subr.mxu0 0.0
    %614 = vmatpush1.msra.mxu0 %v576
    %615 = vmatprep.subr.mxu0 0.0
    %616 = vmatpush2.msra.mxu0 0.0
    %617 = vmatprep.subr.mxu0 0.0
    %618 = vmatpush2.msra.mxu0 0.0
    %619 = vmatprep.subr.mxu0 0.0
    %620 = vmatpush2.msra.mxu0 0.0
    %621 = vmatprep.subr.mxu0 0.0
    %622 = vmatpush2.msra.mxu0 0.0
    %623 = vmatprep.subr.mxu0 0.0
    %624 = vmatpush2.msra.mxu0 0.0
    %625 = vmatprep.subr.mxu0 0.0
    %626 = vmatpush2.msra.mxu0 0.0
    %627 = vmatprep.subr.mxu0 0.0
    %628 = vmatpush2.msra.mxu0 0.0
    %629 = vmatprep.subr.mxu0 0.0
    %630 = vmatpush2.msra.mxu0 0.0
    %631 = vmatprep.subr.mxu0 0.0
    %632 = vmatpush2.msra.mxu0 0.0
    %633 = vmatprep.subr.mxu0 0.0
    %634 = vmatpush2.msra.mxu0 0.0
    %635 = vmatprep.subr.mxu0 0.0
    %636 = vmatpush2.msra.mxu0 0.0
    %637 = vmatprep.subr.mxu0 0.0
    %638 = vmatpush2.msra.mxu0 0.0
    %639 = vmatprep.subr.mxu0 0.0
    %640 = vmatpush2.msra.mxu0 0.0
    %641 = vmatprep.subr.mxu0 0.0
    %642 = vmatpush2.msra.mxu0 0.0
    %643 = vmatprep.subr.mxu0 0.0
    %644 = vmatpush2.msra.mxu0 0.0
    %645 = vmatprep.subr.mxu0 0.0
    %646 = vmatpush2.msra.mxu0 0.0
    %647 = vmatprep.mubr.f32.mxu0 0.0
    %648 = vmatmul.mubr.f32.gmra.mxu0 %v581
    %v649 = vpop.f32.mrf.mxu0
    %v650 = vadd.f32 0.0, %v649
    %v651 = vpop.f32.mrf.mxu0
    %652 = vdwg.mxu0
    %v653 = vadd.f32 %v575, %v650
    %v654 = vtanh.pop %v653
    %655 = vst.msk [vmem:[#allocation3 + $0x3] sm:$0x1] %vm402, %v654
    %v656 = vadd.f32 %v572, %v654
    %v657 = vmul.f32 %v654, %v654
    %v658 = vadd.f32 %v574, %v657
    %v659 = vld [vmem:[#allocation2 + $0x4] sm:$0x1]
    %v660 = vld [vmem:[%s5] sm:$0xff]
    %v661 = vld [vmem:[%s5 + $0x8] sm:$0xff]
    %v662 = vld [vmem:[%s5 + $0x10] sm:$0xff]
    %v663 = vld [vmem:[%s5 + $0x18] sm:$0xff]
    %v665 = vsel %vm162, %v654, 0
    %667 = vmatprep.subr.mxu0 0.0
    %668 = vmatpush1.msra.mxu0 0.0
    %669 = vmatprep.subr.mxu0 0.0
    %670 = vmatpush1.msra.mxu0 0.0
    %671 = vmatprep.subr.mxu0 0.0
    %672 = vmatpush1.msra.mxu0 0.0
    %673 = vmatprep.subr.mxu0 0.0
    %674 = vmatpush1.msra.mxu0 0.0
    %675 = vmatprep.subr.mxu0 0.0
    %676 = vmatpush1.msra.mxu0 0.0
    %677 = vmatprep.subr.mxu0 0.0
    %678 = vmatpush1.msra.mxu0 0.0
    %679 = vmatprep.subr.mxu0 0.0
    %680 = vmatpush1.msra.mxu0 0.0
    %681 = vmatprep.subr.mxu0 0.0
    %682 = vmatpush1.msra.mxu0 0.0
    %683 = vmatprep.subr.mxu0 0.0
    %684 = vmatpush1.msra.mxu0 0.0
    %685 = vmatprep.subr.mxu0 0.0
    %686 = vmatpush1.msra.mxu0 0.0
    %687 = vmatprep.subr.mxu0 0.0
    %688 = vmatpush1.msra.mxu0 0.0
    %689 = vmatprep.subr.mxu0 0.0
    %690 = vmatpush1.msra.mxu0 0.0
    %691 = vmatprep.subr.mxu0 0.0
    %692 = vmatpush1.msra.mxu0 %v663
    %693 = vmatprep.subr.mxu0 0.0
    %694 = vmatpush1.msra.mxu0 %v662
    %695 = vmatprep.subr.mxu0 0.0
    %696 = vmatpush1.msra.mxu0 %v661
    %697 = vmatprep.subr.mxu0 0.0
    %698 = vmatpush1.msra.mxu0 %v660
    %699 = vmatprep.subr.mxu0 0.0
    %700 = vmatpush2.msra.mxu0 0.0
    %701 = vmatprep.subr.mxu0 0.0
    %702 = vmatpush2.msra.mxu0 0.0
    %703 = vmatprep.subr.mxu0 0.0
    %704 = vmatpush2.msra.mxu0 0.0
    %705 = vmatprep.subr.mxu0 0.0
    %706 = vmatpush2.msra.mxu0 0.0
    %707 = vmatprep.subr.mxu0 0.0
    %708 = vmatpush2.msra.mxu0 0.0
    %709 = vmatprep.subr.mxu0 0.0
    %710 = vmatpush2.msra.mxu0 0.0
    %711 = vmatprep.subr.mxu0 0.0
    %712 = vmatpush2.msra.mxu0 0.0
    %713 = vmatprep.subr.mxu0 0.0
    %714 = vmatpush2.msra.mxu0 0.0
    %715 = vmatprep.subr.mxu0 0.0
    %716 = vmatpush2.msra.mxu0 0.0
    %717 = vmatprep.subr.mxu0 0.0
    %718 = vmatpush2.msra.mxu0 0.0
    %719 = vmatprep.subr.mxu0 0.0
    %720 = vmatpush2.msra.mxu0 0.0
    %721 = vmatprep.subr.mxu0 0.0
    %722 = vmatpush2.msra.mxu0 0.0
    %723 = vmatprep.subr.mxu0 0.0
    %724 = vmatpush2.msra.mxu0 0.0
    %725 = vmatprep.subr.mxu0 0.0
    %726 = vmatpush2.msra.mxu0 0.0
    %727 = vmatprep.subr.mxu0 0.0
    %728 = vmatpush2.msra.mxu0 0.0
    %729 = vmatprep.subr.mxu0 0.0
    %730 = vmatpush2.msra.mxu0 0.0
    %731 = vmatprep.mubr.f32.mxu0 0.0
    %732 = vmatmul.mubr.f32.gmra.mxu0 %v665
    %v733 = vpop.f32.mrf.mxu0
    %v734 = vadd.f32 0.0, %v733
    %v735 = vpop.f32.mrf.mxu0
    %736 = vdwg.mxu0
    %v737 = vadd.f32 %v659, %v734
    %v738 = vtanh.pop %v737
    %739 = vst.msk [vmem:[#allocation3 + $0x4] sm:$0x1] %vm402, %v738
    %v740 = vadd.f32 %v656, %v738
    %v741 = vmul.f32 %v738, %v738
    %v742 = vadd.f32 %v658, %v741
    %v743 = vld [vmem:[#allocation2 + $0x5] sm:$0x1]
    %v744 = vld [vmem:[%s5] sm:$0xff]
    %v745 = vld [vmem:[%s5 + $0x8] sm:$0xff]
    %v746 = vld [vmem:[%s5 + $0x10] sm:$0xff]
    %v747 = vld [vmem:[%s5 + $0x18] sm:$0xff]
    %v749 = vsel %vm162, %v738, 0
    %751 = vmatprep.subr.mxu0 0.0
    %752 = vmatpush1.msra.mxu0 0.0
    %753 = vmatprep.subr.mxu0 0.0
    %754 = vmatpush1.msra.mxu0 0.0
    %755 = vmatprep.subr.mxu0 0.0
    %756 = vmatpush1.msra.mxu0 0.0
    %757 = vmatprep.subr.mxu0 0.0
    %758 = vmatpush1.msra.mxu0 0.0
    %759 = vmatprep.subr.mxu0 0.0
    %760 = vmatpush1.msra.mxu0 0.0
    %761 = vmatprep.subr.mxu0 0.0
    %762 = vmatpush1.msra.mxu0 0.0
    %763 = vmatprep.subr.mxu0 0.0
    %764 = vmatpush1.msra.mxu0 0.0
    %765 = vmatprep.subr.mxu0 0.0
    %766 = vmatpush1.msra.mxu0 0.0
    %767 = vmatprep.subr.mxu0 0.0
    %768 = vmatpush1.msra.mxu0 0.0
    %769 = vmatprep.subr.mxu0 0.0
    %770 = vmatpush1.msra.mxu0 0.0
    %771 = vmatprep.subr.mxu0 0.0
    %772 = vmatpush1.msra.mxu0 0.0
    %773 = vmatprep.subr.mxu0 0.0
    %774 = vmatpush1.msra.mxu0 0.0
    %775 = vmatprep.subr.mxu0 0.0
    %776 = vmatpush1.msra.mxu0 %v747
    %777 = vmatprep.subr.mxu0 0.0
    %778 = vmatpush1.msra.mxu0 %v746
    %779 = vmatprep.subr.mxu0 0.0
    %780 = vmatpush1.msra.mxu0 %v745
    %781 = vmatprep.subr.mxu0 0.0
    %782 = vmatpush1.msra.mxu0 %v744
    %783 = vmatprep.subr.mxu0 0.0
    %784 = vmatpush2.msra.mxu0 0.0
    %785 = vmatprep.subr.mxu0 0.0
    %786 = vmatpush2.msra.mxu0 0.0
    %787 = vmatprep.subr.mxu0 0.0
    %788 = vmatpush2.msra.mxu0 0.0
    %789 = vmatprep.subr.mxu0 0.0
    %790 = vmatpush2.msra.mxu0 0.0
    %791 = vmatprep.subr.mxu0 0.0
    %792 = vmatpush2.msra.mxu0 0.0
    %793 = vmatprep.subr.mxu0 0.0
    %794 = vmatpush2.msra.mxu0 0.0
    %795 = vmatprep.subr.mxu0 0.0
    %796 = vmatpush2.msra.mxu0 0.0
    %797 = vmatprep.subr.mxu0 0.0
    %798 = vmatpush2.msra.mxu0 0.0
    %799 = vmatprep.subr.mxu0 0.0
    %800 = vmatpush2.msra.mxu0 0.0
    %801 = vmatprep.subr.mxu0 0.0
    %802 = vmatpush2.msra.mxu0 0.0
    %803 = vmatprep.subr.mxu0 0.0
    %804 = vmatpush2.msra.mxu0 0.0
    %805 = vmatprep.subr.mxu0 0.0
    %806 = vmatpush2.msra.mxu0 0.0
    %807 = vmatprep.subr.mxu0 0.0
    %808 = vmatpush2.msra.mxu0 0.0
    %809 = vmatprep.subr.mxu0 0.0
    %810 = vmatpush2.msra.mxu0 0.0
    %811 = vmatprep.subr.mxu0 0.0
    %812 = vmatpush2.msra.mxu0 0.0
    %813 = vmatprep.subr.mxu0 0.0
    %814 = vmatpush2.msra.mxu0 0.0
    %815 = vmatprep.mubr.f32.mxu0 0.0
    %816 = vmatmul.mubr.f32.gmra.mxu0 %v749
    %v817 = vpop.f32.mrf.mxu0
    %v818 = vadd.f32 0.0, %v817
    %v819 = vpop.f32.mrf.mxu0
    %820 = vdwg.mxu0
    %v821 = vadd.f32 %v743, %v818
    %v822 = vtanh.pop %v821
    %823 = vst.msk [vmem:[#allocation3 + $0x5] sm:$0x1] %vm402, %v822
    %v824 = vadd.f32 %v740, %v822
    %v825 = vmul.f32 %v822, %v822
    %v826 = vadd.f32 %v742, %v825
    %v827 = vld [vmem:[#allocation2 + $0x6] sm:$0x1]
    %v828 = vld [vmem:[%s5] sm:$0xff]
    %v829 = vld [vmem:[%s5 + $0x8] sm:$0xff]
    %v830 = vld [vmem:[%s5 + $0x10] sm:$0xff]
    %v831 = vld [vmem:[%s5 + $0x18] sm:$0xff]
    %v833 = vsel %vm162, %v822, 0
    %835 = vmatprep.subr.mxu0 0.0
    %836 = vmatpush1.msra.mxu0 0.0
    %837 = vmatprep.subr.mxu0 0.0
    %838 = vmatpush1.msra.mxu0 0.0
    %839 = vmatprep.subr.mxu0 0.0
    %840 = vmatpush1.msra.mxu0 0.0
    %841 = vmatprep.subr.mxu0 0.0
    %842 = vmatpush1.msra.mxu0 0.0
    %843 = vmatprep.subr.mxu0 0.0
    %844 = vmatpush1.msra.mxu0 0.0
    %845 = vmatprep.subr.mxu0 0.0
    %846 = vmatpush1.msra.mxu0 0.0
    %847 = vmatprep.subr.mxu0 0.0
    %848 = vmatpush1.msra.mxu0 0.0
    %849 = vmatprep.subr.mxu0 0.0
    %850 = vmatpush1.msra.mxu0 0.0
    %851 = vmatprep.subr.mxu0 0.0
    %852 = vmatpush1.msra.mxu0 0.0
    %853 = vmatprep.subr.mxu0 0.0
    %854 = vmatpush1.msra.mxu0 0.0
    %855 = vmatprep.subr.mxu0 0.0
    %856 = vmatpush1.msra.mxu0 0.0
    %857 = vmatprep.subr.mxu0 0.0
    %858 = vmatpush1.msra.mxu0 0.0
    %859 = vmatprep.subr.mxu0 0.0
    %860 = vmatpush1.msra.mxu0 %v831
    %861 = vmatprep.subr.mxu0 0.0
    %862 = vmatpush1.msra.mxu0 %v830
    %863 = vmatprep.subr.mxu0 0.0
    %864 = vmatpush1.msra.mxu0 %v829
    %865 = vmatprep.subr.mxu0 0.0
    %866 = vmatpush1.msra.mxu0 %v828
    %867 = vmatprep.subr.mxu0 0.0
    %868 = vmatpush2.msra.mxu0 0.0
    %869 = vmatprep.subr.mxu0 0.0
    %870 = vmatpush2.msra.mxu0 0.0
    %871 = vmatprep.subr.mxu0 0.0
    %872 = vmatpush2.msra.mxu0 0.0
    %873 = vmatprep.subr.mxu0 0.0
    %874 = vmatpush2.msra.mxu0 0.0
    %875 = vmatprep.subr.mxu0 0.0
    %876 = vmatpush2.msra.mxu0 0.0
    %877 = vmatprep.subr.mxu0 0.0
    %878 = vmatpush2.msra.mxu0 0.0
    %879 = vmatprep.subr.mxu0 0.0
    %880 = vmatpush2.msra.mxu0 0.0
    %881 = vmatprep.subr.mxu0 0.0
    %882 = vmatpush2.msra.mxu0 0.0
    %883 = vmatprep.subr.mxu0 0.0
    %884 = vmatpush2.msra.mxu0 0.0
    %885 = vmatprep.subr.mxu0 0.0
    %886 = vmatpush2.msra.mxu0 0.0
    %887 = vmatprep.subr.mxu0 0.0
    %888 = vmatpush2.msra.mxu0 0.0
    %889 = vmatprep.subr.mxu0 0.0
    %890 = vmatpush2.msra.mxu0 0.0
    %891 = vmatprep.subr.mxu0 0.0
    %892 = vmatpush2.msra.mxu0 0.0
    %893 = vmatprep.subr.mxu0 0.0
    %894 = vmatpush2.msra.mxu0 0.0
    %895 = vmatprep.subr.mxu0 0.0
    %896 = vmatpush2.msra.mxu0 0.0
    %897 = vmatprep.subr.mxu0 0.0
    %898 = vmatpush2.msra.mxu0 0.0
    %899 = vmatprep.mubr.f32.mxu0 0.0
    %900 = vmatmul.mubr.f32.gmra.mxu0 %v833
    %v901 = vpop.f32.mrf.mxu0
    %v902 = vadd.f32 0.0, %v901
    %v903 = vpop.f32.mrf.mxu0
    %904 = vdwg.mxu0
    %v905 = vadd.f32 %v827, %v902
    %v906 = vtanh.pop %v905
    %907 = vst.msk [vmem:[#allocation3 + $0x6] sm:$0x1] %vm402, %v906
    %v908 = vadd.f32 %v824, %v906
    %v909 = vmul.f32 %v906, %v906
    %v910 = vadd.f32 %v826, %v909
    %v911 = vld [vmem:[#allocation2 + $0x7] sm:$0x1]
    %v912 = vld [vmem:[%s5] sm:$0xff]
    %v913 = vld [vmem:[%s5 + $0x8] sm:$0xff]
    %v914 = vld [vmem:[%s5 + $0x10] sm:$0xff]
    %v915 = vld [vmem:[%s5 + $0x18] sm:$0xff]
    %v917 = vsel %vm162, %v906, 0
    %919 = vmatprep.subr.mxu0 0.0
    %920 = vmatpush1.msra.mxu0 0.0
    %921 = vmatprep.subr.mxu0 0.0
    %922 = vmatpush1.msra.mxu0 0.0
    %923 = vmatprep.subr.mxu0 0.0
    %924 = vmatpush1.msra.mxu0 0.0
    %925 = vmatprep.subr.mxu0 0.0
    %926 = vmatpush1.msra.mxu0 0.0
    %927 = vmatprep.subr.mxu0 0.0
    %928 = vmatpush1.msra.mxu0 0.0
    %929 = vmatprep.subr.mxu0 0.0
    %930 = vmatpush1.msra.mxu0 0.0
    %931 = vmatprep.subr.mxu0 0.0
    %932 = vmatpush1.msra.mxu0 0.0
    %933 = vmatprep.subr.mxu0 0.0
    %934 = vmatpush1.msra.mxu0 0.0
    %935 = vmatprep.subr.mxu0 0.0
    %936 = vmatpush1.msra.mxu0 0.0
    %937 = vmatprep.subr.mxu0 0.0
    %938 = vmatpush1.msra.mxu0 0.0
    %939 = vmatprep.subr.mxu0 0.0
    %940 = vmatpush1.msra.mxu0 0.0
    %941 = vmatprep.subr.mxu0 0.0
    %942 = vmatpush1.msra.mxu0 0.0
    %943 = vmatprep.subr.mxu0 0.0
    %944 = vmatpush1.msra.mxu0 %v915
    %945 = vmatprep.subr.mxu0 0.0
    %946 = vmatpush1.msra.mxu0 %v914
    %947 = vmatprep.subr.mxu0 0.0
    %948 = vmatpush1.msra.mxu0 %v913
    %949 = vmatprep.subr.mxu0 0.0
    %950 = vmatpush1.msra.mxu0 %v912
    %951 = vmatprep.subr.mxu0 0.0
    %952 = vmatpush2.msra.mxu0 0.0
    %953 = vmatprep.subr.mxu0 0.0
    %954 = vmatpush2.msra.mxu0 0.0
    %955 = vmatprep.subr.mxu0 0.0
    %956 = vmatpush2.msra.mxu0 0.0
    %957 = vmatprep.subr.mxu0 0.0
    %958 = vmatpush2.msra.mxu0 0.0
    %959 = vmatprep.subr.mxu0 0.0
    %960 = vmatpush2.msra.mxu0 0.0
    %961 = vmatprep.subr.mxu0 0.0
    %962 = vmatpush2.msra.mxu0 0.0
    %963 = vmatprep.subr.mxu0 0.0
    %964 = vmatpush2.msra.mxu0 0.0
    %965 = vmatprep.subr.mxu0 0.0
    %966 = vmatpush2.msra.mxu0 0.0
    %967 = vmatprep.subr.mxu0 0.0
    %968 = vmatpush2.msra.mxu0 0.0
    %969 = vmatprep.subr.mxu0 0.0
    %970 = vmatpush2.msra.mxu0 0.0
    %971 = vmatprep.subr.mxu0 0.0
    %972 = vmatpush2.msra.mxu0 0.0
    %973 = vmatprep.subr.mxu0 0.0
    %974 = vmatpush2.msra.mxu0 0.0
    %975 = vmatprep.subr.mxu0 0.0
    %976 = vmatpush2.msra.mxu0 0.0
    %977 = vmatprep.subr.mxu0 0.0
    %978 = vmatpush2.msra.mxu0 0.0
    %979 = vmatprep.subr.mxu0 0.0
    %980 = vmatpush2.msra.mxu0 0.0
    %981 = vmatprep.subr.mxu0 0.0
    %982 = vmatpush2.msra.mxu0 0.0
    %983 = vmatprep.mubr.f32.mxu0 0.0
    %984 = vmatmul.mubr.f32.gmra.mxu0 %v917
    %v985 = vpop.f32.mrf.mxu0
    %v986 = vadd.f32 0.0, %v985
    %v987 = vpop.f32.mrf.mxu0
    %988 = vdwg.mxu0
    %v989 = vadd.f32 %v911, %v986
    %v990 = vtanh.pop %v989
    %991 = vst.msk [vmem:[#allocation3 + $0x7] sm:$0x1] %vm402, %v990
    %v992 = vadd.f32 %v908, %v990
    %v993 = vmul.f32 %v990, %v990
    %v994 = vadd.f32 %v910, %v993
    %v995 = vmul.f32 %v992, 0.125
    %v996 = vmul.f32 %v994, 0.125
    %v997 = vmul.f32 %v995, %v995
    %v998 = vsub.f32 %v996, %v997
    %v999 = vld [vmem:[#allocation3] sm:$0xff]
    %v1000 = vlaneseq
    %v1001 = vshrl.u32 %v1000, 7
    %v1002 = vsub.s32 0, %v1001
    %v1003 = vrot.slane %v995, %v1002
    %v1004 = vsub.f32 %v999, %v1003
    %v1005 = vadd.f32 %v998, 1e-05
    %v1006 = vrsqrt.pop %v1005
    %v1007 = vlaneseq
    %v1008 = vshrl.u32 %v1007, 7
    %v1009 = vsub.s32 0, %v1008
    %v1010 = vrot.slane %v1006, %v1009
    %v1011 = vmul.f32 %v1004, %v1010
    %v1012 = vld [vmem:[%s7] sm:$0x1]
    %v1014 = vlaneseq
    %v1015 = vshrl.u32 %v1014, 7
    %v1016 = vsub.s32 0, %v1015
    %v1017 = vrot.slane %v1012, %v1016
    %v1019 = vmul.f32 %v1011, %v1017
    %v1020 = vld [vmem:[%s8] sm:$0x1]
    %v1022 = vlaneseq
    %v1023 = vshrl.u32 %v1022, 7
    %v1024 = vsub.s32 0, %v1023
    %v1025 = vrot.slane %v1020, %v1024
    %v1027 = vadd.f32 %v1019, %v1025
    %v1028 = vmax.f32 %v1027, 0.0
    %v1029 = vld [vmem:[%s9] sm:$0xff]
    %v1030 = vld [vmem:[%s9 + $0x8] sm:$0xff]
    %v1031 = vld [vmem:[%s9 + $0x10] sm:$0xff]
    %v1032 = vld [vmem:[%s9 + $0x18] sm:$0xff]
    %v1034 = vsel %vm162, %v1028, 0
    %1036 = vmatprep.subr.mxu0 0.0
    %1037 = vmatpush1.msra.mxu0 0.0
    %1038 = vmatprep.subr.mxu0 0.0
    %1039 = vmatpush1.msra.mxu0 0.0
    %1040 = vmatprep.subr.mxu0 0.0
    %1041 = vmatpush1.msra.mxu0 0.0
    %1042 = vmatprep.subr.mxu0 0.0
    %1043 = vmatpush1.msra.mxu0 0.0
    %1044 = vmatprep.subr.mxu0 0.0
    %1045 = vmatpush1.msra.mxu0 0.0
    %1046 = vmatprep.subr.mxu0 0.0
    %1047 = vmatpush1.msra.mxu0 0.0
    %1048 = vmatprep.subr.mxu0 0.0
    %1049 = vmatpush1.msra.mxu0 0.0
    %1050 = vmatprep.subr.mxu0 0.0
    %1051 = vmatpush1.msra.mxu0 0.0
    %1052 = vmatprep.subr.mxu0 0.0
    %1053 = vmatpush1.msra.mxu0 0.0
    %1054 = vmatprep.subr.mxu0 0.0
    %1055 = vmatpush1.msra.mxu0 0.0
    %1056 = vmatprep.subr.mxu0 0.0
    %1057 = vmatpush1.msra.mxu0 0.0
    %1058 = vmatprep.subr.mxu0 0.0
    %1059 = vmatpush1.msra.mxu0 0.0
    %1060 = vmatprep.subr.mxu0 0.0
    %1061 = vmatpush1.msra.mxu0 %v1032
    %1062 = vmatprep.subr.mxu0 0.0
    %1063 = vmatpush1.msra.mxu0 %v1031
    %1064 = vmatprep.subr.mxu0 0.0
    %1065 = vmatpush1.msra.mxu0 %v1030
    %1066 = vmatprep.subr.mxu0 0.0
    %1067 = vmatpush1.msra.mxu0 %v1029
    %1068 = vmatprep.subr.mxu0 0.0
    %1069 = vmatpush2.msra.mxu0 0.0
    %1070 = vmatprep.subr.mxu0 0.0
    %1071 = vmatpush2.msra.mxu0 0.0
    %1072 = vmatprep.subr.mxu0 0.0
    %1073 = vmatpush2.msra.mxu0 0.0
    %1074 = vmatprep.subr.mxu0 0.0
    %1075 = vmatpush2.msra.mxu0 0.0
    %1076 = vmatprep.subr.mxu0 0.0
    %1077 = vmatpush2.msra.mxu0 0.0
    %1078 = vmatprep.subr.mxu0 0.0
    %1079 = vmatpush2.msra.mxu0 0.0
    %1080 = vmatprep.subr.mxu0 0.0
    %1081 = vmatpush2.msra.mxu0 0.0
    %1082 = vmatprep.subr.mxu0 0.0
    %1083 = vmatpush2.msra.mxu0 0.0
    %1084 = vmatprep.subr.mxu0 0.0
    %1085 = vmatpush2.msra.mxu0 0.0
    %1086 = vmatprep.subr.mxu0 0.0
    %1087 = vmatpush2.msra.mxu0 0.0
    %1088 = vmatprep.subr.mxu0 0.0
    %1089 = vmatpush2.msra.mxu0 0.0
    %1090 = vmatprep.subr.mxu0 0.0
    %1091 = vmatpush2.msra.mxu0 0.0
    %1092 = vmatprep.subr.mxu0 0.0
    %1093 = vmatpush2.msra.mxu0 0.0
    %1094 = vmatprep.subr.mxu0 0.0
    %1095 = vmatpush2.msra.mxu0 0.0
    %1096 = vmatprep.subr.mxu0 0.0
    %1097 = vmatpush2.msra.mxu0 0.0
    %1098 = vmatprep.subr.mxu0 0.0
    %1099 = vmatpush2.msra.mxu0 0.0
    %1100 = vmatprep.mubr.f32.mxu0 0.0
    %1101 = vmatmul.mubr.f32.gmra.mxu0 %v1034
    %v1102 = vpop.f32.mrf.mxu0
    %v1103 = vadd.f32 0.0, %v1102
    %v1104 = vpop.f32.mrf.mxu0
    %1105 = vdwg.mxu0
    %vm1106 = vcmask 7168
    %1107 = vst.msk [vmem:[%s10] sm:$0xff] %vm1106, %v1103
    // Predicated region
    $region46: #{tpu_custom_call.1} parent=1 // pred_check
      _
    $region47: #{tpu_custom_call.1} parent=1 // pred_check_branch
      %1109 = sbr.rel (0) target = $region49
    $region48: #{tpu_custom_call.1} parent=1 // pred_region
      _
    $region49: #{tpu_custom_call.1} parent=1 // pred_fallthru
      _
    // Predicated region
    $region50: #{tpu_custom_call.1} parent=1 // pred_check
      _
    $region51: #{tpu_custom_call.1} parent=1 // pred_check_branch
      %1111 = sbr.rel (0) target = $region53
    $region52: #{tpu_custom_call.1} parent=1 // pred_region
      _
    $region53: #{tpu_custom_call.1} parent=1 // pred_fallthru
      _
    %1112 = vsyncpa [#allocation5], 1

</llo_original>
